<compile_context>
chip_gen: v6e
topology: v6e:2x2x1
jax: 0.10.0
libtpu: 0.0.40
codegen_flags: <defaults>
</compile_context>

<pallas_src>
import math

import jax
import jax.numpy as jnp
from jax.experimental import pallas as pl
from jax.experimental.pallas import tpu as pltpu


_VMEM_LIMIT = 48 * 1024 * 1024   # conservative: below v7x's 64 MiB physical VMEM
_ROW_TILE = 512                  # output-row tile (sublane axis)
_COL_TILE = 512                  # output-col tile (lane axis)


def _round_up(x, m):
    return ((x + m - 1) // m) * m


def _pad_rows(a, n_pad):
    n = a.shape[0]
    if n == n_pad:
        return a
    return jnp.pad(a, ((0, n_pad - n), (0, 0)))


# ----------------------------- kernels ------------------------------------ #

def _proj_kernel(x_ref, wt_ref, b_ref, o_ref):
    # o = x @ W^T + b  (W pre-transposed outside; scale folded in for "left")
    o_ref[...] = (jnp.dot(x_ref[...], wt_ref[...],
                          preferred_element_type=jnp.float32)
                  + b_ref[...]).astype(o_ref.dtype)


def _pair_kernel(x_ref, y_ref, wlt_ref, bl_ref, wrt_ref, br_ref, o_ref):
    # scale is folded into wlt / bl outside the kernel
    left = jnp.dot(x_ref[...], wlt_ref[...],
                   preferred_element_type=jnp.float32) + bl_ref[...]
    right = jnp.dot(y_ref[...], wrt_ref[...],
                    preferred_element_type=jnp.float32) + br_ref[...]
    s = jnp.sum(left * right, axis=-1)            # (tm,)
    o_ref[...] = s[None, :].astype(o_ref.dtype)   # lane-dense (1, tm) store


def _pairwise_kernel(l_ref, r_ref, o_ref):
    # out[tm, tn] = left[tm, K] . right[tn, K]^T  without an explicit transpose
    o_ref[...] = jax.lax.dot_general(
        l_ref[...], r_ref[...],
        dimension_numbers=(((1,), (1,)), ((), ())),
        preferred_element_type=jnp.float32).astype(o_ref.dtype)


# ----------------------------- wrapper ------------------------------------ #

def _project(x_pad, wt, b2, row_tile):
    """Tiled linear projection: (n_pad, n_hid) @ (n_hid, n_hid) + (1, n_hid)."""
    n_pad, n_hid = x_pad.shape
    grid = (n_pad // row_tile,)
    return pl.pallas_call(
        _proj_kernel,
        out_shape=jax.ShapeDtypeStruct((n_pad, n_hid), jnp.float32),
        grid=grid,
        in_specs=[
            pl.BlockSpec((row_tile, n_hid), lambda i: (i, 0)),
            pl.BlockSpec((n_hid, n_hid), lambda i: (0, 0)),   # VMEM-resident
            pl.BlockSpec((1, n_hid), lambda i: (0, 0)),        # VMEM-resident
        ],
        out_specs=pl.BlockSpec((row_tile, n_hid), lambda i: (i, 0)),
        compiler_params=pltpu.CompilerParams(
            dimension_semantics=("parallel",),
            vmem_limit_bytes=_VMEM_LIMIT),
    )(x_pad, wt, b2)


def matcher_forward(x, y, wl, bl, wr, br, *, pair=True):
    n_hid = x.shape[-1]
    inv_sqrt_hd = 1.0 / math.sqrt(float(n_hid))
    N, M = x.shape[0], y.shape[0]

    # Pre-transpose weights outside the kernel and fold the 1/sqrt(n_hid)
    # scale into the left projection (weights + bias), so the kernels do no
    # transposes and no output-tile scaling.
    wlt = (wl.T * inv_sqrt_hd).astype(jnp.float32)
    blv = (bl * inv_sqrt_hd).reshape(1, n_hid).astype(jnp.float32)
    wrt = wr.T.astype(jnp.float32)
    brv = br.reshape(1, n_hid).astype(jnp.float32)

    if pair:
        assert N == M, "pair=True requires x and y to have the same batch size"
        # Lane-dense output: (1, tm) blocks -> tm must be a multiple of 128.
        tm = min(_ROW_TILE, _round_up(N, 128))
        n_pad = _round_up(N, tm)
        xp = _pad_rows(x, n_pad)
        yp = _pad_rows(y, n_pad)
        out = pl.pallas_call(
            _pair_kernel,
            out_shape=jax.ShapeDtypeStruct((1, n_pad), jnp.float32),
            grid=(n_pad // tm,),
            in_specs=[
                pl.BlockSpec((tm, n_hid), lambda i: (i, 0)),
                pl.BlockSpec((tm, n_hid), lambda i: (i, 0)),
                pl.BlockSpec((n_hid, n_hid), lambda i: (0, 0)),
                pl.BlockSpec((1, n_hid), lambda i: (0, 0)),
                pl.BlockSpec((n_hid, n_hid), lambda i: (0, 0)),
                pl.BlockSpec((1, n_hid), lambda i: (0, 0)),
            ],
            out_specs=pl.BlockSpec((1, tm), lambda i: (0, i)),
            compiler_params=pltpu.CompilerParams(
                dimension_semantics=("parallel",),
                vmem_limit_bytes=_VMEM_LIMIT),
        )(xp, yp, wlt, blv, wrt, brv)
        return out[0, :N]

    # pair=False: hoist projections out of the (N x M) tiling so they are
    # computed O(N + M) times, not once per output tile.
    tm = min(_ROW_TILE, _round_up(N, 8))     # output sublane tile
    tn = min(_COL_TILE, _round_up(M, 128))   # output lane tile
    n_pad = _round_up(N, tm)
    m_pad = _round_up(M, tn)
    xp = _pad_rows(x, n_pad)
    yp = _pad_rows(y, m_pad)

    left = _project(xp, wlt, blv, tm)    # (n_pad, n_hid), scale already applied
    right = _project(yp, wrt, brv, tn)   # (m_pad, n_hid)

    out = pl.pallas_call(
        _pairwise_kernel,
        out_shape=jax.ShapeDtypeStruct((n_pad, m_pad), jnp.float32),
        grid=(n_pad // tm, m_pad // tn),
        in_specs=[
            pl.BlockSpec((tm, n_hid), lambda i, j: (i, 0)),
            pl.BlockSpec((tn, n_hid), lambda i, j: (j, 0)),
        ],
        out_specs=pl.BlockSpec((tm, tn), lambda i, j: (i, j)),
        compiler_params=pltpu.CompilerParams(
            dimension_semantics=("parallel", "parallel"),
            vmem_limit_bytes=_VMEM_LIMIT),
    )(left, right)
    return out[:N, :M]


# ----------------------------- reference ---------------------------------- #

def matcher_reference(x, y, wl, bl, wr, br, *, pair=True):
    n_hid = x.shape[-1]
    left = x @ wl.T + bl
    right = y @ wr.T + br
    if pair:
        return jnp.sum(left * right, axis=-1) / jnp.sqrt(jnp.float32(n_hid))
    return (left @ right.T) / jnp.sqrt(jnp.float32(n_hid))


# ------------------------------- main -------------------------------------- #

if __name__ == "__main__":
    n_hid = 32
    N = 8
    M = 12

    key = jax.random.PRNGKey(0)
    kx, ky, ky2, kwl, kbl, kwr, kbr = jax.random.split(key, 7)

    # Linear weight: (out, in), bias: (out,)  -- PyTorch layout
    x = jax.random.normal(kx, (N, n_hid), dtype=jnp.float32)
    y = jax.random.normal(ky, (N, n_hid), dtype=jnp.float32)
    y2 = jax.random.normal(ky2, (M, n_hid), dtype=jnp.float32)
    wl = jax.random.normal(kwl, (n_hid, n_hid), dtype=jnp.float32) * 0.1
    bl = jax.random.normal(kbl, (n_hid,), dtype=jnp.float32) * 0.1
    wr = jax.random.normal(kwr, (n_hid, n_hid), dtype=jnp.float32) * 0.1
    br = jax.random.normal(kbr, (n_hid,), dtype=jnp.float32) * 0.1

    # pair=True path (small)
    out_pair = matcher_forward(x, y, wl, bl, wr, br, pair=True)
    jax.block_until_ready(out_pair)
    ref_pair = matcher_reference(x, y, wl, bl, wr, br, pair=True)
    assert out_pair.shape == (N,)
    assert jnp.allclose(out_pair, ref_pair, atol=1e-4, rtol=1e-4)

    # pair=False path (small, rectangular N x M)
    out_mat = matcher_forward(x, y2, wl, bl, wr, br, pair=False)
    jax.block_until_ready(out_mat)
    ref_mat = matcher_reference(x, y2, wl, bl, wr, br, pair=False)
    assert out_mat.shape == (N, M)
    assert jnp.allclose(out_mat, ref_mat, atol=1e-4, rtol=1e-4)

    # Larger, non-tile-aligned shapes to exercise the multi-tile grid + padding.
    N2, M2 = 600, 200
    kx2, ky3 = jax.random.split(kx, 2)
    xb = jax.random.normal(kx2, (N2, n_hid), dtype=jnp.float32)
    yb = jax.random.normal(ky3, (M2, n_hid), dtype=jnp.float32)

    out_big_mat = matcher_forward(xb, yb, wl, bl, wr, br, pair=False)
    jax.block_until_ready(out_big_mat)
    ref_big_mat = matcher_reference(xb, yb, wl, bl, wr, br, pair=False)
    assert out_big_mat.shape == (N2, M2)
    assert jnp.allclose(out_big_mat, ref_big_mat, atol=1e-4, rtol=1e-4)

    out_big_pair = matcher_forward(xb, xb, wl, bl, wr, br, pair=True)
    jax.block_until_ready(out_big_pair)
    ref_big_pair = matcher_reference(xb, xb, wl, bl, wr, br, pair=True)
    assert out_big_pair.shape == (N2,)
    assert jnp.allclose(out_big_pair, ref_big_pair, atol=1e-4, rtol=1e-4)

    print("KERNEL_OK")
</pallas_src>

<mosaic_0001>
module attributes {stable_mosaic.version = 11 : i64} {
  func.func @_pair_kernel(%arg0: i32, %arg1: memref<128x32xf32, #tpu.memory_space<vmem>>, %arg2: memref<128x32xf32, #tpu.memory_space<vmem>>, %arg3: memref<32x32xf32, #tpu.memory_space<vmem>>, %arg4: memref<1x32xf32, #tpu.memory_space<vmem>>, %arg5: memref<32x32xf32, #tpu.memory_space<vmem>>, %arg6: memref<1x32xf32, #tpu.memory_space<vmem>>, %arg7: memref<1x128xf32, #tpu.memory_space<vmem>>) attributes {dimension_semantics = [#tpu.dimension_semantics<parallel>], iteration_bounds = array<i64: 1>, scalar_prefetch = 0 : i64, scratch_operands = 0 : i64, tpu.core_type = #tpu.core_type<tc>, window_params = [{transform_indices = @transform_0, window_bounds = array<i64: 128, 32>}, {transform_indices = @transform_1, window_bounds = array<i64: 128, 32>}, {pipeline_mode = #tpu.pipeline_mode<synchronous>, transform_indices = @transform_2, window_bounds = array<i64: 32, 32>}, {pipeline_mode = #tpu.pipeline_mode<synchronous>, transform_indices = @transform_3, window_bounds = array<i64: 1, 32>}, {pipeline_mode = #tpu.pipeline_mode<synchronous>, transform_indices = @transform_4, window_bounds = array<i64: 32, 32>}, {pipeline_mode = #tpu.pipeline_mode<synchronous>, transform_indices = @transform_5, window_bounds = array<i64: 1, 32>}, {transform_indices = @transform_6, window_bounds = array<i64: 1, 128>}]} {
    %c0 = arith.constant 0 : index
    %c0_0 = arith.constant 0 : index
    %0 = vector.load %arg1[%c0, %c0_0] : memref<128x32xf32, #tpu.memory_space<vmem>>, vector<128x32xf32>
    %c0_1 = arith.constant 0 : index
    %c0_2 = arith.constant 0 : index
    %1 = vector.load %arg3[%c0_1, %c0_2] : memref<32x32xf32, #tpu.memory_space<vmem>>, vector<32x32xf32>
    %cst = arith.constant dense<0.000000e+00> : vector<128x32xf32>
    %2 = tpu.matmul %0, %1, %cst {dimension_numbers = #tpu.dot_dimension_numbers<[1], [0], [0], [1], [0, 0, 1, 1], [], []>} : vector<128x32xf32>, vector<32x32xf32>, vector<128x32xf32> -> vector<128x32xf32>
    %c0_3 = arith.constant 0 : index
    %c0_4 = arith.constant 0 : index
    %3 = vector.load %arg4[%c0_3, %c0_4] : memref<1x32xf32, #tpu.memory_space<vmem>>, vector<1x32xf32>
    %4 = vector.broadcast %3 : vector<1x32xf32> to vector<128x32xf32>
    %5 = arith.addf %2, %4 : vector<128x32xf32>
    %c0_5 = arith.constant 0 : index
    %c0_6 = arith.constant 0 : index
    %6 = vector.load %arg2[%c0_5, %c0_6] : memref<128x32xf32, #tpu.memory_space<vmem>>, vector<128x32xf32>
    %c0_7 = arith.constant 0 : index
    %c0_8 = arith.constant 0 : index
    %7 = vector.load %arg5[%c0_7, %c0_8] : memref<32x32xf32, #tpu.memory_space<vmem>>, vector<32x32xf32>
    %cst_9 = arith.constant dense<0.000000e+00> : vector<128x32xf32>
    %8 = tpu.matmul %6, %7, %cst_9 {dimension_numbers = #tpu.dot_dimension_numbers<[1], [0], [0], [1], [0, 0, 1, 1], [], []>} : vector<128x32xf32>, vector<32x32xf32>, vector<128x32xf32> -> vector<128x32xf32>
    %c0_10 = arith.constant 0 : index
    %c0_11 = arith.constant 0 : index
    %9 = vector.load %arg6[%c0_10, %c0_11] : memref<1x32xf32, #tpu.memory_space<vmem>>, vector<1x32xf32>
    %10 = vector.broadcast %9 : vector<1x32xf32> to vector<128x32xf32>
    %11 = arith.addf %8, %10 : vector<128x32xf32>
    %12 = arith.mulf %5, %11 : vector<128x32xf32>
    %cst_12 = arith.constant dense<0.000000e+00> : vector<128xf32>
    %13 = vector.multi_reduction <add>, %12, %cst_12 [1] : vector<128x32xf32> to vector<128xf32>
    %14 = vector.shape_cast %13 : vector<128xf32> to vector<1x128xf32>
    %c0_13 = arith.constant 0 : index
    %c0_14 = arith.constant 0 : index
    %15 = vector.load %arg7[%c0_13, %c0_14] : memref<1x128xf32, #tpu.memory_space<vmem>>, vector<1x128xf32>
    tpu.vector_store %arg7[%c0_13, %c0_14], %14 {strides = array<i32>} : memref<1x128xf32, #tpu.memory_space<vmem>>, vector<1x128xf32>,
    return
  }
  func.func @transform_0(%arg0: i32) -> (i32, i32) {
    %c0_i32 = arith.constant 0 : i32
    %c0_i32_0 = arith.constant 0 : i32
    return %arg0, %c0_i32 : i32, i32
  }
  func.func @transform_1(%arg0: i32) -> (i32, i32) {
    %c0_i32 = arith.constant 0 : i32
    %c0_i32_0 = arith.constant 0 : i32
    return %arg0, %c0_i32 : i32, i32
  }
  func.func @transform_2(%arg0: i32) -> (i32, i32) {
    %c0_i32 = arith.constant 0 : i32
    %c0_i32_0 = arith.constant 0 : i32
    %c0_i32_1 = arith.constant 0 : i32
    return %c0_i32, %c0_i32_0 : i32, i32
  }
  func.func @transform_3(%arg0: i32) -> (i32, i32) {
    %c0_i32 = arith.constant 0 : i32
    %c0_i32_0 = arith.constant 0 : i32
    %c0_i32_1 = arith.constant 0 : i32
    return %c0_i32, %c0_i32_0 : i32, i32
  }
  func.func @transform_4(%arg0: i32) -> (i32, i32) {
    %c0_i32 = arith.constant 0 : i32
    %c0_i32_0 = arith.constant 0 : i32
    %c0_i32_1 = arith.constant 0 : i32
    return %c0_i32, %c0_i32_0 : i32, i32
  }
  func.func @transform_5(%arg0: i32) -> (i32, i32) {
    %c0_i32 = arith.constant 0 : i32
    %c0_i32_0 = arith.constant 0 : i32
    %c0_i32_1 = arith.constant 0 : i32
    return %c0_i32, %c0_i32_0 : i32, i32
  }
  func.func @transform_6(%arg0: i32) -> (i32, i32) {
    %c0_i32 = arith.constant 0 : i32
    %c0_i32_0 = arith.constant 0 : i32
    return %c0_i32, %arg0 : i32, i32
  }
}

</mosaic_0001>

<llo_original>
// kernel: tpu_custom_call.1
$region0: #{tpu_custom_call.1}
  #allocation0 [shape = 'u32[]', space=smem, size = 0x4, offset = 0x4, fixed_abs, tag = 'smem constant byte address 0x4 - core index']
  #allocation1 [shape = 'u32[144,128]{1,0:T(1,128)}', space=vmem, size = 0x12000, scoped, tag = 'internal scratch']
  %s0 = inlined_call_operand.vmem [shape: f32[128,32], index: 0, kind: input, shape index: {}]
  %s1 = inlined_call_operand.vmem [shape: f32[128,32], index: 1, kind: input, shape index: {}]
  %s2 = inlined_call_operand.vmem [shape: f32[32,32], index: 2, kind: input, shape index: {}]
  %s3 = inlined_call_operand.vmem [shape: f32[1,32], index: 3, kind: input, shape index: {}]
  %s4 = inlined_call_operand.vmem [shape: f32[32,32], index: 4, kind: input, shape index: {}]
  %s5 = inlined_call_operand.vmem [shape: f32[1,32], index: 5, kind: input, shape index: {}]
  %s6 = inlined_call_operand.hbm [shape: f32[1,128], index: 6, kind: output, shape index: {}]
  %s7 = sld [smem:[#allocation0]]
  $region34: #{tpu_custom_call.1} parent=0
    _
  %s9 = ssub.s32 1, %s7
  %s10 = scalar_select 0, %s9, %s7
  $region1: #{tpu_custom_call.1} parent=0
    #allocation2 [shape = 'u8[512]{0}', space=vmem, size = 0x400, scoped, tag = 'output window, operand 0, single buffered']
    #allocation3 [shape = 's32[1]{0}', space=sflag, size = 0x4, scoped, tag = 'scoped memory for tpu_custom_call.1']
    %11 = vsyncpa [#allocation3], 0
    // Predicated region
    $region2: #{tpu_custom_call.1} parent=1 // pred_check
      _
    $region3: #{tpu_custom_call.1} parent=1 // pred_check_branch
      %13 = sbr.rel (0) target = $region5
    $region4: #{tpu_custom_call.1} parent=1 // pred_region
      _
    $region5: #{tpu_custom_call.1} parent=1 // pred_fallthru
      _
    // Predicated region
    $region6: #{tpu_custom_call.1} parent=1 // pred_check
      _
    $region7: #{tpu_custom_call.1} parent=1 // pred_check_branch
      %15 = sbr.rel (0) target = $region9
    $region8: #{tpu_custom_call.1} parent=1 // pred_region
      _
    $region9: #{tpu_custom_call.1} parent=1 // pred_fallthru
      _
    // Predicated region
    $region10: #{tpu_custom_call.1} parent=1 // pred_check
      _
    $region11: #{tpu_custom_call.1} parent=1 // pred_check_branch
      %17 = sbr.rel (0) target = $region13
    $region12: #{tpu_custom_call.1} parent=1 // pred_region
      _
    $region13: #{tpu_custom_call.1} parent=1 // pred_fallthru
      _
    // Predicated region
    $region14: #{tpu_custom_call.1} parent=1 // pred_check
      _
    $region15: #{tpu_custom_call.1} parent=1 // pred_check_branch
      %19 = sbr.rel (0) target = $region17
    $region16: #{tpu_custom_call.1} parent=1 // pred_region
      _
    $region17: #{tpu_custom_call.1} parent=1 // pred_fallthru
      _
    // Predicated region
    $region18: #{tpu_custom_call.1} parent=1 // pred_check
      _
    $region19: #{tpu_custom_call.1} parent=1 // pred_check_branch
      %21 = sbr.rel (0) target = $region21
    $region20: #{tpu_custom_call.1} parent=1 // pred_region
      _
    $region21: #{tpu_custom_call.1} parent=1 // pred_fallthru
      _
    // Predicated region
    $region22: #{tpu_custom_call.1} parent=1 // pred_check
      _
    $region23: #{tpu_custom_call.1} parent=1 // pred_check_branch
      %23 = sbr.rel (0) target = $region25
    $region24: #{tpu_custom_call.1} parent=1 // pred_region
      _
    $region25: #{tpu_custom_call.1} parent=1 // pred_fallthru
      _
    %v24 = vld [vmem:[%s0] sm:$0xff]
    %v25 = vld [vmem:[%s0 + $0x8] sm:$0xff]
    %v26 = vld [vmem:[%s0 + $0x10] sm:$0xff]
    %v27 = vld [vmem:[%s0 + $0x18] sm:$0xff]
    %v28 = vld [vmem:[%s0 + $0x20] sm:$0xff]
    %v29 = vld [vmem:[%s0 + $0x28] sm:$0xff]
    %v30 = vld [vmem:[%s0 + $0x30] sm:$0xff]
    %v31 = vld [vmem:[%s0 + $0x38] sm:$0xff]
    %v32 = vld [vmem:[%s0 + $0x40] sm:$0xff]
    %v33 = vld [vmem:[%s0 + $0x48] sm:$0xff]
    %v34 = vld [vmem:[%s0 + $0x50] sm:$0xff]
    %v35 = vld [vmem:[%s0 + $0x58] sm:$0xff]
    %v36 = vld [vmem:[%s0 + $0x60] sm:$0xff]
    %v37 = vld [vmem:[%s0 + $0x68] sm:$0xff]
    %v38 = vld [vmem:[%s0 + $0x70] sm:$0xff]
    %v39 = vld [vmem:[%s0 + $0x78] sm:$0xff]
    %v40 = vld [vmem:[%s2] sm:$0xff]
    %v41 = vld [vmem:[%s2 + $0x8] sm:$0xff]
    %v42 = vld [vmem:[%s2 + $0x10] sm:$0xff]
    %v43 = vld [vmem:[%s2 + $0x18] sm:$0xff]
    %v44 = vld [vmem:[%s3] sm:$0x1]
    %v46 = vlaneseq
    %v47 = vshrl.u32 %v46, 7
    %v48 = vsub.s32 0, %v47
    %v49 = vrot.slane %v44, %v48
    %vm51 = vcmask 261120
    %v53 = vsel %vm51, %v24, 0
    %v56 = vsel %vm51, %v25, 0
    %v59 = vsel %vm51, %v26, 0
    %v62 = vsel %vm51, %v27, 0
    %v65 = vsel %vm51, %v28, 0
    %v68 = vsel %vm51, %v29, 0
    %v71 = vsel %vm51, %v30, 0
    %v74 = vsel %vm51, %v31, 0
    %v77 = vsel %vm51, %v32, 0
    %v80 = vsel %vm51, %v33, 0
    %v83 = vsel %vm51, %v34, 0
    %v86 = vsel %vm51, %v35, 0
    %v89 = vsel %vm51, %v36, 0
    %v92 = vsel %vm51, %v37, 0
    %v95 = vsel %vm51, %v38, 0
    %v98 = vsel %vm51, %v39, 0
    %100 = vmatprep.subr.mxu0 0.0
    %101 = vmatpush1.msra.mxu0 0.0
    %102 = vmatprep.subr.mxu0 0.0
    %103 = vmatpush1.msra.mxu0 0.0
    %104 = vmatprep.subr.mxu0 0.0
    %105 = vmatpush1.msra.mxu0 0.0
    %106 = vmatprep.subr.mxu0 0.0
    %107 = vmatpush1.msra.mxu0 0.0
    %108 = vmatprep.subr.mxu0 0.0
    %109 = vmatpush1.msra.mxu0 0.0
    %110 = vmatprep.subr.mxu0 0.0
    %111 = vmatpush1.msra.mxu0 0.0
    %112 = vmatprep.subr.mxu0 0.0
    %113 = vmatpush1.msra.mxu0 0.0
    %114 = vmatprep.subr.mxu0 0.0
    %115 = vmatpush1.msra.mxu0 0.0
    %116 = vmatprep.subr.mxu0 0.0
    %117 = vmatpush1.msra.mxu0 0.0
    %118 = vmatprep.subr.mxu0 0.0
    %119 = vmatpush1.msra.mxu0 0.0
    %120 = vmatprep.subr.mxu0 0.0
    %121 = vmatpush1.msra.mxu0 0.0
    %122 = vmatprep.subr.mxu0 0.0
    %123 = vmatpush1.msra.mxu0 0.0
    %124 = vmatprep.subr.mxu0 0.0
    %125 = vmatpush1.msra.mxu0 %v43
    %126 = vmatprep.subr.mxu0 0.0
    %127 = vmatpush1.msra.mxu0 %v42
    %128 = vmatprep.subr.mxu0 0.0
    %129 = vmatpush1.msra.mxu0 %v41
    %130 = vmatprep.subr.mxu0 0.0
    %131 = vmatpush1.msra.mxu0 %v40
    %132 = vmatprep.subr.mxu0 0.0
    %133 = vmatpush2.msra.mxu0 0.0
    %134 = vmatprep.subr.mxu0 0.0
    %135 = vmatpush2.msra.mxu0 0.0
    %136 = vmatprep.subr.mxu0 0.0
    %137 = vmatpush2.msra.mxu0 0.0
    %138 = vmatprep.subr.mxu0 0.0
    %139 = vmatpush2.msra.mxu0 0.0
    %140 = vmatprep.subr.mxu0 0.0
    %141 = vmatpush2.msra.mxu0 0.0
    %142 = vmatprep.subr.mxu0 0.0
    %143 = vmatpush2.msra.mxu0 0.0
    %144 = vmatprep.subr.mxu0 0.0
    %145 = vmatpush2.msra.mxu0 0.0
    %146 = vmatprep.subr.mxu0 0.0
    %147 = vmatpush2.msra.mxu0 0.0
    %148 = vmatprep.subr.mxu0 0.0
    %149 = vmatpush2.msra.mxu0 0.0
    %150 = vmatprep.subr.mxu0 0.0
    %151 = vmatpush2.msra.mxu0 0.0
    %152 = vmatprep.subr.mxu0 0.0
    %153 = vmatpush2.msra.mxu0 0.0
    %154 = vmatprep.subr.mxu0 0.0
    %155 = vmatpush2.msra.mxu0 0.0
    %156 = vmatprep.subr.mxu0 0.0
    %157 = vmatpush2.msra.mxu0 0.0
    %158 = vmatprep.subr.mxu0 0.0
    %159 = vmatpush2.msra.mxu0 0.0
    %160 = vmatprep.subr.mxu0 0.0
    %161 = vmatpush2.msra.mxu0 0.0
    %162 = vmatprep.subr.mxu0 0.0
    %163 = vmatpush2.msra.mxu0 0.0
    %164 = vmatprep.mubr.f32.mxu0 0.0
    %165 = vmatmul.mubr.f32.gmra.mxu0 %v53
    %v166 = vpop.f32.mrf.mxu0
    %v167 = vadd.f32 %v49, %v166
    %v168 = vpop.f32.mrf.mxu0
    %169 = vmatprep.mubr.f32.mxu0 0.0
    %170 = vmatmul.mubr.f32.gmra.mxu0 %v56
    %v171 = vpop.f32.mrf.mxu0
    %v172 = vadd.f32 %v49, %v171
    %v173 = vpop.f32.mrf.mxu0
    %174 = vmatprep.mubr.f32.mxu0 0.0
    %175 = vmatmul.mubr.f32.gmra.mxu0 %v59
    %v176 = vpop.f32.mrf.mxu0
    %v177 = vadd.f32 %v49, %v176
    %v178 = vpop.f32.mrf.mxu0
    %179 = vmatprep.mubr.f32.mxu0 0.0
    %180 = vmatmul.mubr.f32.gmra.mxu0 %v62
    %v181 = vpop.f32.mrf.mxu0
    %v182 = vadd.f32 %v49, %v181
    %v183 = vpop.f32.mrf.mxu0
    %184 = vmatprep.mubr.f32.mxu0 0.0
    %185 = vmatmul.mubr.f32.gmra.mxu0 %v65
    %v186 = vpop.f32.mrf.mxu0
    %v187 = vadd.f32 %v49, %v186
    %v188 = vpop.f32.mrf.mxu0
    %189 = vmatprep.mubr.f32.mxu0 0.0
    %190 = vmatmul.mubr.f32.gmra.mxu0 %v68
    %v191 = vpop.f32.mrf.mxu0
    %v192 = vadd.f32 %v49, %v191
    %v193 = vpop.f32.mrf.mxu0
    %194 = vmatprep.mubr.f32.mxu0 0.0
    %195 = vmatmul.mubr.f32.gmra.mxu0 %v71
    %v196 = vpop.f32.mrf.mxu0
    %v197 = vadd.f32 %v49, %v196
    %v198 = vpop.f32.mrf.mxu0
    %199 = vmatprep.mubr.f32.mxu0 0.0
    %200 = vmatmul.mubr.f32.gmra.mxu0 %v74
    %v201 = vpop.f32.mrf.mxu0
    %v202 = vadd.f32 %v49, %v201
    %v203 = vpop.f32.mrf.mxu0
    %204 = vmatprep.mubr.f32.mxu0 0.0
    %205 = vmatmul.mubr.f32.gmra.mxu0 %v77
    %v206 = vpop.f32.mrf.mxu0
    %v207 = vadd.f32 %v49, %v206
    %v208 = vpop.f32.mrf.mxu0
    %209 = vmatprep.mubr.f32.mxu0 0.0
    %210 = vmatmul.mubr.f32.gmra.mxu0 %v80
    %v211 = vpop.f32.mrf.mxu0
    %v212 = vadd.f32 %v49, %v211
    %v213 = vpop.f32.mrf.mxu0
    %214 = vmatprep.mubr.f32.mxu0 0.0
    %215 = vmatmul.mubr.f32.gmra.mxu0 %v83
    %v216 = vpop.f32.mrf.mxu0
    %v217 = vadd.f32 %v49, %v216
    %v218 = vpop.f32.mrf.mxu0
    %219 = vmatprep.mubr.f32.mxu0 0.0
    %220 = vmatmul.mubr.f32.gmra.mxu0 %v86
    %v221 = vpop.f32.mrf.mxu0
    %v222 = vadd.f32 %v49, %v221
    %v223 = vpop.f32.mrf.mxu0
    %224 = vmatprep.mubr.f32.mxu0 0.0
    %225 = vmatmul.mubr.f32.gmra.mxu0 %v89
    %v226 = vpop.f32.mrf.mxu0
    %v227 = vadd.f32 %v49, %v226
    %v228 = vpop.f32.mrf.mxu0
    %229 = vmatprep.mubr.f32.mxu0 0.0
    %230 = vmatmul.mubr.f32.gmra.mxu0 %v92
    %v231 = vpop.f32.mrf.mxu0
    %v232 = vadd.f32 %v49, %v231
    %v233 = vpop.f32.mrf.mxu0
    %234 = vmatprep.mubr.f32.mxu0 0.0
    %235 = vmatmul.mubr.f32.gmra.mxu0 %v95
    %v236 = vpop.f32.mrf.mxu0
    %v237 = vadd.f32 %v49, %v236
    %v238 = vpop.f32.mrf.mxu0
    %239 = vmatprep.mubr.f32.mxu0 0.0
    %240 = vmatmul.mubr.f32.gmra.mxu0 %v98
    %v241 = vpop.f32.mrf.mxu0
    %v242 = vadd.f32 %v49, %v241
    %v243 = vpop.f32.mrf.mxu0
    %244 = vdwg.mxu0
    %v245 = vld [vmem:[%s1] sm:$0xff]
    %v246 = vld [vmem:[%s1 + $0x8] sm:$0xff]
    %v247 = vld [vmem:[%s1 + $0x10] sm:$0xff]
    %v248 = vld [vmem:[%s1 + $0x18] sm:$0xff]
    %v249 = vld [vmem:[%s1 + $0x20] sm:$0xff]
    %v250 = vld [vmem:[%s1 + $0x28] sm:$0xff]
    %v251 = vld [vmem:[%s1 + $0x30] sm:$0xff]
    %v252 = vld [vmem:[%s1 + $0x38] sm:$0xff]
    %v253 = vld [vmem:[%s1 + $0x40] sm:$0xff]
    %v254 = vld [vmem:[%s1 + $0x48] sm:$0xff]
    %v255 = vld [vmem:[%s1 + $0x50] sm:$0xff]
    %v256 = vld [vmem:[%s1 + $0x58] sm:$0xff]
    %v257 = vld [vmem:[%s1 + $0x60] sm:$0xff]
    %v258 = vld [vmem:[%s1 + $0x68] sm:$0xff]
    %v259 = vld [vmem:[%s1 + $0x70] sm:$0xff]
    %v260 = vld [vmem:[%s1 + $0x78] sm:$0xff]
    %v261 = vld [vmem:[%s4] sm:$0xff]
    %v262 = vld [vmem:[%s4 + $0x8] sm:$0xff]
    %v263 = vld [vmem:[%s4 + $0x10] sm:$0xff]
    %v264 = vld [vmem:[%s4 + $0x18] sm:$0xff]
    %v265 = vld [vmem:[%s5] sm:$0x1]
    %v267 = vlaneseq
    %v268 = vshrl.u32 %v267, 7
    %v269 = vsub.s32 0, %v268
    %v270 = vrot.slane %v265, %v269
    %v273 = vsel %vm51, %v245, 0
    %v276 = vsel %vm51, %v246, 0
    %v279 = vsel %vm51, %v247, 0
    %v282 = vsel %vm51, %v248, 0
    %v285 = vsel %vm51, %v249, 0
    %v288 = vsel %vm51, %v250, 0
    %v291 = vsel %vm51, %v251, 0
    %v294 = vsel %vm51, %v252, 0
    %v297 = vsel %vm51, %v253, 0
    %v300 = vsel %vm51, %v254, 0
    %v303 = vsel %vm51, %v255, 0
    %v306 = vsel %vm51, %v256, 0
    %v309 = vsel %vm51, %v257, 0
    %v312 = vsel %vm51, %v258, 0
    %v315 = vsel %vm51, %v259, 0
    %v318 = vsel %vm51, %v260, 0
    %320 = vmatprep.subr.mxu0 0.0
    %321 = vmatpush1.msra.mxu0 0.0
    %322 = vmatprep.subr.mxu0 0.0
    %323 = vmatpush1.msra.mxu0 0.0
    %324 = vmatprep.subr.mxu0 0.0
    %325 = vmatpush1.msra.mxu0 0.0
    %326 = vmatprep.subr.mxu0 0.0
    %327 = vmatpush1.msra.mxu0 0.0
    %328 = vmatprep.subr.mxu0 0.0
    %329 = vmatpush1.msra.mxu0 0.0
    %330 = vmatprep.subr.mxu0 0.0
    %331 = vmatpush1.msra.mxu0 0.0
    %332 = vmatprep.subr.mxu0 0.0
    %333 = vmatpush1.msra.mxu0 0.0
    %334 = vmatprep.subr.mxu0 0.0
    %335 = vmatpush1.msra.mxu0 0.0
    %336 = vmatprep.subr.mxu0 0.0
    %337 = vmatpush1.msra.mxu0 0.0
    %338 = vmatprep.subr.mxu0 0.0
    %339 = vmatpush1.msra.mxu0 0.0
    %340 = vmatprep.subr.mxu0 0.0
    %341 = vmatpush1.msra.mxu0 0.0
    %342 = vmatprep.subr.mxu0 0.0
    %343 = vmatpush1.msra.mxu0 0.0
    %344 = vmatprep.subr.mxu0 0.0
    %345 = vmatpush1.msra.mxu0 %v264
    %346 = vmatprep.subr.mxu0 0.0
    %347 = vmatpush1.msra.mxu0 %v263
    %348 = vmatprep.subr.mxu0 0.0
    %349 = vmatpush1.msra.mxu0 %v262
    %350 = vmatprep.subr.mxu0 0.0
    %351 = vmatpush1.msra.mxu0 %v261
    %352 = vmatprep.subr.mxu0 0.0
    %353 = vmatpush2.msra.mxu0 0.0
    %354 = vmatprep.subr.mxu0 0.0
    %355 = vmatpush2.msra.mxu0 0.0
    %356 = vmatprep.subr.mxu0 0.0
    %357 = vmatpush2.msra.mxu0 0.0
    %358 = vmatprep.subr.mxu0 0.0
    %359 = vmatpush2.msra.mxu0 0.0
    %360 = vmatprep.subr.mxu0 0.0
    %361 = vmatpush2.msra.mxu0 0.0
    %362 = vmatprep.subr.mxu0 0.0
    %363 = vmatpush2.msra.mxu0 0.0
    %364 = vmatprep.subr.mxu0 0.0
    %365 = vmatpush2.msra.mxu0 0.0
    %366 = vmatprep.subr.mxu0 0.0
    %367 = vmatpush2.msra.mxu0 0.0
    %368 = vmatprep.subr.mxu0 0.0
    %369 = vmatpush2.msra.mxu0 0.0
    %370 = vmatprep.subr.mxu0 0.0
    %371 = vmatpush2.msra.mxu0 0.0
    %372 = vmatprep.subr.mxu0 0.0
    %373 = vmatpush2.msra.mxu0 0.0
    %374 = vmatprep.subr.mxu0 0.0
    %375 = vmatpush2.msra.mxu0 0.0
    %376 = vmatprep.subr.mxu0 0.0
    %377 = vmatpush2.msra.mxu0 0.0
    %378 = vmatprep.subr.mxu0 0.0
    %379 = vmatpush2.msra.mxu0 0.0
    %380 = vmatprep.subr.mxu0 0.0
    %381 = vmatpush2.msra.mxu0 0.0
    %382 = vmatprep.subr.mxu0 0.0
    %383 = vmatpush2.msra.mxu0 0.0
    %384 = vmatprep.mubr.f32.mxu0 0.0
    %385 = vmatmul.mubr.f32.gmra.mxu0 %v273
    %v386 = vpop.f32.mrf.mxu0
    %v387 = vadd.f32 %v270, %v386
    %v388 = vpop.f32.mrf.mxu0
    %389 = vmatprep.mubr.f32.mxu0 0.0
    %390 = vmatmul.mubr.f32.gmra.mxu0 %v276
    %v391 = vpop.f32.mrf.mxu0
    %v392 = vadd.f32 %v270, %v391
    %v393 = vpop.f32.mrf.mxu0
    %394 = vmatprep.mubr.f32.mxu0 0.0
    %395 = vmatmul.mubr.f32.gmra.mxu0 %v279
    %v396 = vpop.f32.mrf.mxu0
    %v397 = vadd.f32 %v270, %v396
    %v398 = vpop.f32.mrf.mxu0
    %399 = vmatprep.mubr.f32.mxu0 0.0
    %400 = vmatmul.mubr.f32.gmra.mxu0 %v282
    %v401 = vpop.f32.mrf.mxu0
    %v402 = vadd.f32 %v270, %v401
    %v403 = vpop.f32.mrf.mxu0
    %404 = vmatprep.mubr.f32.mxu0 0.0
    %405 = vmatmul.mubr.f32.gmra.mxu0 %v285
    %v406 = vpop.f32.mrf.mxu0
    %v407 = vadd.f32 %v270, %v406
    %v408 = vpop.f32.mrf.mxu0
    %409 = vmatprep.mubr.f32.mxu0 0.0
    %410 = vmatmul.mubr.f32.gmra.mxu0 %v288
    %v411 = vpop.f32.mrf.mxu0
    %v412 = vadd.f32 %v270, %v411
    %v413 = vpop.f32.mrf.mxu0
    %414 = vmatprep.mubr.f32.mxu0 0.0
    %415 = vmatmul.mubr.f32.gmra.mxu0 %v291
    %v416 = vpop.f32.mrf.mxu0
    %v417 = vadd.f32 %v270, %v416
    %v418 = vpop.f32.mrf.mxu0
    %419 = vmatprep.mubr.f32.mxu0 0.0
    %420 = vmatmul.mubr.f32.gmra.mxu0 %v294
    %v421 = vpop.f32.mrf.mxu0
    %v422 = vadd.f32 %v270, %v421
    %v423 = vpop.f32.mrf.mxu0
    %424 = vmatprep.mubr.f32.mxu0 0.0
    %425 = vmatmul.mubr.f32.gmra.mxu0 %v297
    %v426 = vpop.f32.mrf.mxu0
    %v427 = vadd.f32 %v270, %v426
    %v428 = vpop.f32.mrf.mxu0
    %429 = vmatprep.mubr.f32.mxu0 0.0
    %430 = vmatmul.mubr.f32.gmra.mxu0 %v300
    %v431 = vpop.f32.mrf.mxu0
    %v432 = vadd.f32 %v270, %v431
    %v433 = vpop.f32.mrf.mxu0
    %434 = vmatprep.mubr.f32.mxu0 0.0
    %435 = vmatmul.mubr.f32.gmra.mxu0 %v303
    %v436 = vpop.f32.mrf.mxu0
    %v437 = vadd.f32 %v270, %v436
    %v438 = vpop.f32.mrf.mxu0
    %439 = vmatprep.mubr.f32.mxu0 0.0
    %440 = vmatmul.mubr.f32.gmra.mxu0 %v306
    %v441 = vpop.f32.mrf.mxu0
    %v442 = vadd.f32 %v270, %v441
    %v443 = vpop.f32.mrf.mxu0
    %444 = vmatprep.mubr.f32.mxu0 0.0
    %445 = vmatmul.mubr.f32.gmra.mxu0 %v309
    %v446 = vpop.f32.mrf.mxu0
    %v447 = vadd.f32 %v270, %v446
    %v448 = vpop.f32.mrf.mxu0
    %449 = vmatprep.mubr.f32.mxu0 0.0
    %450 = vmatmul.mubr.f32.gmra.mxu0 %v312
    %v451 = vpop.f32.mrf.mxu0
    %v452 = vadd.f32 %v270, %v451
    %v453 = vpop.f32.mrf.mxu0
    %454 = vmatprep.mubr.f32.mxu0 0.0
    %455 = vmatmul.mubr.f32.gmra.mxu0 %v315
    %v456 = vpop.f32.mrf.mxu0
    %v457 = vadd.f32 %v270, %v456
    %v458 = vpop.f32.mrf.mxu0
    %459 = vmatprep.mubr.f32.mxu0 0.0
    %460 = vmatmul.mubr.f32.gmra.mxu0 %v318
    %v461 = vpop.f32.mrf.mxu0
    %v462 = vadd.f32 %v270, %v461
    %v463 = vpop.f32.mrf.mxu0
    %464 = vdwg.mxu0
    %v465 = vmul.f32 %v167, %v387
    %v466 = vmul.f32 %v172, %v392
    %v467 = vmul.f32 %v177, %v397
    %v468 = vmul.f32 %v182, %v402
    %v469 = vmul.f32 %v187, %v407
    %v470 = vmul.f32 %v192, %v412
    %v471 = vmul.f32 %v197, %v417
    %v472 = vmul.f32 %v202, %v422
    %v473 = vmul.f32 %v207, %v427
    %v474 = vmul.f32 %v212, %v432
    %v475 = vmul.f32 %v217, %v437
    %v476 = vmul.f32 %v222, %v442
    %v477 = vmul.f32 %v227, %v447
    %v478 = vmul.f32 %v232, %v452
    %v479 = vmul.f32 %v237, %v457
    %v480 = vmul.f32 %v242, %v462
    %v481 = vsel %vm51, %v465, 0.0
    %482 = vadd.xlane.f32.xlu0 %v481
    %v483 = vpop.xlane.xlu0 %482
    %v484 = vsel %vm51, %v466, 0.0
    %485 = vadd.xlane.f32.xlu0 %v484
    %v486 = vpop.xlane.xlu0 %485
    %v487 = vsel %vm51, %v467, 0.0
    %488 = vadd.xlane.f32.xlu0 %v487
    %v489 = vpop.xlane.xlu0 %488
    %v490 = vsel %vm51, %v468, 0.0
    %491 = vadd.xlane.f32.xlu0 %v490
    %v492 = vpop.xlane.xlu0 %491
    %v493 = vsel %vm51, %v469, 0.0
    %494 = vadd.xlane.f32.xlu0 %v493
    %v495 = vpop.xlane.xlu0 %494
    %v496 = vsel %vm51, %v470, 0.0
    %497 = vadd.xlane.f32.xlu0 %v496
    %v498 = vpop.xlane.xlu0 %497
    %v499 = vsel %vm51, %v471, 0.0
    %500 = vadd.xlane.f32.xlu0 %v499
    %v501 = vpop.xlane.xlu0 %500
    %v502 = vsel %vm51, %v472, 0.0
    %503 = vadd.xlane.f32.xlu0 %v502
    %v504 = vpop.xlane.xlu0 %503
    %v505 = vsel %vm51, %v473, 0.0
    %506 = vadd.xlane.f32.xlu0 %v505
    %v507 = vpop.xlane.xlu0 %506
    %v508 = vsel %vm51, %v474, 0.0
    %509 = vadd.xlane.f32.xlu0 %v508
    %v510 = vpop.xlane.xlu0 %509
    %v511 = vsel %vm51, %v475, 0.0
    %512 = vadd.xlane.f32.xlu0 %v511
    %v513 = vpop.xlane.xlu0 %512
    %v514 = vsel %vm51, %v476, 0.0
    %515 = vadd.xlane.f32.xlu0 %v514
    %v516 = vpop.xlane.xlu0 %515
    %v517 = vsel %vm51, %v477, 0.0
    %518 = vadd.xlane.f32.xlu0 %v517
    %v519 = vpop.xlane.xlu0 %518
    %v520 = vsel %vm51, %v478, 0.0
    %521 = vadd.xlane.f32.xlu0 %v520
    %v522 = vpop.xlane.xlu0 %521
    %v523 = vsel %vm51, %v479, 0.0
    %524 = vadd.xlane.f32.xlu0 %v523
    %v525 = vpop.xlane.xlu0 %524
    %v526 = vsel %vm51, %v480, 0.0
    %527 = vadd.xlane.f32.xlu0 %v526
    %v528 = vpop.xlane.xlu0 %527
    %v545 = vlaneseq
    %v546 = vand.u32 %v545, 127
    %v547 = vlaneseq
    %v548 = vshrl.u32 %v547, 7
    %v549 = vsub.s32 %v546, %v548
    %v550 = vrot.slane %v483, %v549
    %v551 = vadd.s32 %v546, 4294967288
    %v552 = vlaneseq
    %v553 = vshrl.u32 %v552, 7
    %v554 = vsub.s32 %v551, %v553
    %v555 = vrot.slane %v486, %v554
    %vm556 = vcmask 130112
    %v557 = vsel %vm556, %v555, %v550
    %v558 = vadd.s32 %v546, 4294967280
    %v559 = vlaneseq
    %v560 = vshrl.u32 %v559, 7
    %v561 = vsub.s32 %v558, %v560
    %v562 = vrot.slane %v489, %v561
    %vm563 = vcmask 195712
    %v564 = vsel %vm563, %v562, %v557
    %v565 = vadd.s32 %v546, 4294967272
    %v566 = vlaneseq
    %v567 = vshrl.u32 %v566, 7
    %v568 = vsub.s32 %v565, %v567
    %v569 = vrot.slane %v492, %v568
    %vm570 = vcmask 261312
    %v571 = vsel %vm570, %v569, %v564
    %v572 = vadd.s32 %v546, 4294967264
    %v573 = vlaneseq
    %v574 = vshrl.u32 %v573, 7
    %v575 = vsub.s32 %v572, %v574
    %v576 = vrot.slane %v495, %v575
    %vm577 = vcmask 326912
    %v578 = vsel %vm577, %v576, %v571
    %v579 = vadd.s32 %v546, 4294967256
    %v580 = vlaneseq
    %v581 = vshrl.u32 %v580, 7
    %v582 = vsub.s32 %v579, %v581
    %v583 = vrot.slane %v498, %v582
    %vm584 = vcmask 392512
    %v585 = vsel %vm584, %v583, %v578
    %v586 = vadd.s32 %v546, 4294967248
    %v587 = vlaneseq
    %v588 = vshrl.u32 %v587, 7
    %v589 = vsub.s32 %v586, %v588
    %v590 = vrot.slane %v501, %v589
    %vm591 = vcmask 458112
    %v592 = vsel %vm591, %v590, %v585
    %v593 = vadd.s32 %v546, 4294967240
    %v594 = vlaneseq
    %v595 = vshrl.u32 %v594, 7
    %v596 = vsub.s32 %v593, %v595
    %v597 = vrot.slane %v504, %v596
    %vm598 = vcmask 523712
    %v599 = vsel %vm598, %v597, %v592
    %v600 = vadd.s32 %v546, 4294967232
    %v601 = vlaneseq
    %v602 = vshrl.u32 %v601, 7
    %v603 = vsub.s32 %v600, %v602
    %v604 = vrot.slane %v507, %v603
    %vm605 = vcmask 589312
    %v606 = vsel %vm605, %v604, %v599
    %v607 = vadd.s32 %v546, 4294967224
    %v608 = vlaneseq
    %v609 = vshrl.u32 %v608, 7
    %v610 = vsub.s32 %v607, %v609
    %v611 = vrot.slane %v510, %v610
    %vm612 = vcmask 654912
    %v613 = vsel %vm612, %v611, %v606
    %v614 = vadd.s32 %v546, 4294967216
    %v615 = vlaneseq
    %v616 = vshrl.u32 %v615, 7
    %v617 = vsub.s32 %v614, %v616
    %v618 = vrot.slane %v513, %v617
    %vm619 = vcmask 720512
    %v620 = vsel %vm619, %v618, %v613
    %v621 = vadd.s32 %v546, 4294967208
    %v622 = vlaneseq
    %v623 = vshrl.u32 %v622, 7
    %v624 = vsub.s32 %v621, %v623
    %v625 = vrot.slane %v516, %v624
    %vm626 = vcmask 786112
    %v627 = vsel %vm626, %v625, %v620
    %v628 = vadd.s32 %v546, 4294967200
    %v629 = vlaneseq
    %v630 = vshrl.u32 %v629, 7
    %v631 = vsub.s32 %v628, %v630
    %v632 = vrot.slane %v519, %v631
    %vm633 = vcmask 851712
    %v634 = vsel %vm633, %v632, %v627
    %v635 = vadd.s32 %v546, 4294967192
    %v636 = vlaneseq
    %v637 = vshrl.u32 %v636, 7
    %v638 = vsub.s32 %v635, %v637
    %v639 = vrot.slane %v522, %v638
    %vm640 = vcmask 917312
    %v641 = vsel %vm640, %v639, %v634
    %v642 = vadd.s32 %v546, 4294967184
    %v643 = vlaneseq
    %v644 = vshrl.u32 %v643, 7
    %v645 = vsub.s32 %v642, %v644
    %v646 = vrot.slane %v525, %v645
    %vm647 = vcmask 982912
    %v648 = vsel %vm647, %v646, %v641
    %v649 = vadd.s32 %v546, 4294967176
    %v650 = vlaneseq
    %v651 = vshrl.u32 %v650, 7
    %v652 = vsub.s32 %v649, %v651
    %v653 = vrot.slane %v528, %v652
    %vm654 = vcmask 1048512
    %v655 = vsel %vm654, %v653, %v648
    %657 = vst [vmem:[#allocation2] sm:$0x1] %v655
    // Predicated region
    $region26: #{tpu_custom_call.1} parent=1 // pred_check
      _
    $region27: #{tpu_custom_call.1} parent=1 // pred_check_branch
      %659 = sbr.rel (0) target = $region29
    $region28: #{tpu_custom_call.1} parent=1 // pred_region
      %s661 = ssub.s32 16, 16
      %662 = vsyncadd [#allocation3], %s661
      %s664 = sshll.u32 [#allocation2], 4
      %s665 = int_to_ptr.vmem [resolvable:$true] %s664
      %667 = dma.vmem_to_hbm [thread:$0]  %s665, 16, %s6, [#allocation3]
    $region29: #{tpu_custom_call.1} parent=1 // pred_fallthru
      _
    // Predicated region
    $region30: #{tpu_custom_call.1} parent=1 // pred_check
      _
    $region31: #{tpu_custom_call.1} parent=1 // pred_check_branch
      %669 = sbr.rel (0) target = $region33
    $region32: #{tpu_custom_call.1} parent=1 // pred_region
      %670 = dma.done [#allocation3], 16
    $region33: #{tpu_custom_call.1} parent=1 // pred_fallthru
      _
    %671 = vsyncpa [#allocation3], 1

</llo_original>
